<compile_context>
chip_gen: v7x
topology: tpu7x:2x2x1
jax: 0.10.0
libtpu: 0.0.40
codegen_flags: <defaults>
</compile_context>

<pallas_src>
import jax
import jax.numpy as jnp
from jax.experimental import pallas as pl
from jax.experimental.pallas import tpu as pltpu


_SUB = 16  # batch-tile granularity (bf16 sublane packing friendly; fine for f32 too)


def _round_up(x: int, m: int) -> int:
    return ((x + m - 1) // m) * m


# --------------------------------------------------------------------------- kernel
def _make_kernel(num_rest_layers: int, half_w: int):
    """Kernel body: (Linear+ReLU)* hidden layers + fused mu/std head into one slab."""

    def kernel(*refs):
        if num_rest_layers > 0:
            x_ref, w0_ref, b0_ref, wr_ref, br_ref, wh_ref, bh_ref, out_ref = refs
        else:
            x_ref, w0_ref, b0_ref, wh_ref, bh_ref, out_ref = refs

        # Layer 0: x is already in the weight dtype (bf16 by default) => no cast.
        h = jnp.dot(x_ref[...], w0_ref[...],
                    preferred_element_type=jnp.float32) + b0_ref[...]
        h = jnp.maximum(h, 0.0)                              # ReLU (f32, VPU)

        for l in range(num_rest_layers):                     # static unroll
            h = jnp.dot(h.astype(wr_ref.dtype), wr_ref[l],
                        preferred_element_type=jnp.float32) + br_ref[l]
            h = jnp.maximum(h, 0.0)

        # Fused head: one MXU launch produces the packed (TB, OUT_W) slab with
        # mu pre-activations in lanes [0:half_w) and std pre-activations in
        # lanes [half_w:OUT_W).
        z = jnp.dot(h.astype(wh_ref.dtype), wh_ref[...],
                    preferred_element_type=jnp.float32) + bh_ref[...]

        lane = jax.lax.broadcasted_iota(jnp.int32, z.shape, 1)
        mu = jnp.tanh(z)
        # softplus with torch's threshold=20 pass-through semantics
        sp = jnp.where(z > 20.0, z, jnp.log1p(jnp.exp(jnp.minimum(z, 20.0)))) + 1e-5
        out_ref[...] = jnp.where(lane < half_w, mu, sp)

    return kernel


# --------------------------------------------------------------------------- packing
def pack_params(params, state_dim: int, param_dtype=jnp.bfloat16):
    """Pack per-layer params into padded, DMA-friendly buffers.

    layer 0 weight  -> [S_pad, D]  (S_pad = round_up(state_dim,128); keeps x narrow)
    layers 1..L-1   -> one [L-1, D, D] buffer (+ [L-1, 1, D] f32 biases)
    mu/std heads    -> one [D, OUT_W] buffer laid out directly in the fused output
                       slab layout (mu cols [0:A), std cols [half_w:half_w+A)).
    Zero padding is semantically inert (ReLU(0)=0, padded lanes sliced in wrapper).
    """
    hidden = params["hidden"]
    L = len(hidden)
    hdims = [w.shape[1] for (w, _) in hidden]
    D = max(_round_up(h, 128) for h in hdims)
    S_pad = _round_up(state_dim, 128)

    action_dim = params["mu"][0].shape[1]
    half_w = 64 * ((action_dim + 63) // 64)          # OUT_W = 2*half_w is a multiple of 128
    out_w = 2 * half_w

    w0, b0 = hidden[0]
    w0_p = jnp.zeros((S_pad, D), param_dtype).at[: w0.shape[0], : w0.shape[1]].set(
        w0.astype(param_dtype))
    b0_p = jnp.zeros((1, D), jnp.float32).at[0, : b0.shape[-1]].set(b0.reshape(-1))

    if L > 1:
        w_rest = jnp.zeros((L - 1, D, D), param_dtype)
        b_rest = jnp.zeros((L - 1, 1, D), jnp.float32)
        for l, (w, b) in enumerate(hidden[1:]):
            w_rest = w_rest.at[l, : w.shape[0], : w.shape[1]].set(w.astype(param_dtype))
            b_rest = b_rest.at[l, 0, : b.shape[-1]].set(b.reshape(-1))
    else:
        w_rest, b_rest = None, None

    H = hidden[-1][0].shape[1]
    w_mu, b_mu = params["mu"]
    w_sd, b_sd = params["std"]
    w_head = jnp.zeros((D, out_w), param_dtype)
    b_head = jnp.zeros((1, out_w), jnp.float32)
    w_head = w_head.at[:H, :action_dim].set(w_mu.astype(param_dtype))
    w_head = w_head.at[:H, half_w: half_w + action_dim].set(w_sd.astype(param_dtype))
    b_head = b_head.at[0, :action_dim].set(b_mu.reshape(-1))
    b_head = b_head.at[0, half_w: half_w + action_dim].set(b_sd.reshape(-1))

    return dict(w0=w0_p, b0=b0_p, w_rest=w_rest, b_rest=b_rest,
                w_head=w_head, b_head=b_head,
                S_pad=S_pad, D=D, half_w=half_w, out_w=out_w,
                L=L, action_dim=action_dim)


# --------------------------------------------------------------------------- wrapper
def _resident_spec(block_shape, single_buffer: bool):
    """Constant-index (VMEM-resident) BlockSpec, single-buffered when supported."""
    index_map = {2: (lambda i: (0, 0)), 3: (lambda i: (0, 0, 0))}[len(block_shape)]
    if single_buffer and hasattr(pl, "Buffered"):
        try:
            return pl.BlockSpec(block_shape, index_map, pipeline_mode=pl.Buffered(1))
        except TypeError:
            pass
    return pl.BlockSpec(block_shape, index_map)


def ppo_policy_forward(x, packed, *, max_batch_tile: int = 2048):
    S_pad, D = packed["S_pad"], packed["D"]
    half_w, out_w = packed["half_w"], packed["out_w"]
    L, action_dim = packed["L"], packed["action_dim"]
    param_dtype = packed["w0"].dtype
    p_bytes = jnp.dtype(param_dtype).itemsize
    B, S = x.shape

    # ---- resident weight bytes (counted x2 below: conservative if double-buffered)
    weight_bytes = (packed["w0"].size * p_bytes + packed["b0"].size * 4
                    + packed["w_head"].size * p_bytes + packed["b_head"].size * 4)
    if L > 1:
        weight_bytes += packed["w_rest"].size * p_bytes + packed["b_rest"].size * 4

    def vmem_estimate(tb):
        io = 2 * tb * S_pad * p_bytes + 2 * tb * out_w * 4   # double-buffered x / out slab
        work = 3 * tb * D * 4 + tb * out_w * 4               # activation intermediates
        return 2 * weight_bytes + io + work

    # ---- generation-aware VMEM budget (v5e/v6e: 128 MiB parts, v7x: 64 MiB)
    try:
        vmem_cap = int(pltpu.get_tpu_info().vmem_capacity_bytes)
    except Exception:
        vmem_cap = 64 * 2**20
    budget = int(vmem_cap * 0.72)        # ~92 MiB on 128 MiB parts, ~46 MiB on v7x

    # ---- batch tile TB (multiple of _SUB), grows until the budget binds
    TB = min(max_batch_tile, _round_up(B, _SUB))
    while TB > _SUB and vmem_estimate(TB) > budget:
        TB //= 2
    TB = max(_SUB, (TB // _SUB) * _SUB)
    # v7x megacore: give the "parallel" axis >= 2 grid steps for mid/large batches
    if B > 2 * _SUB:
        TB = min(TB, max(_SUB, _round_up((B + 1) // 2, _SUB)))
    B_pad = _round_up(B, TB)

    # ---- pad + cast x in one op (bf16 input halves the dominant DMA stream)
    x_pad = jnp.zeros((B_pad, S_pad), param_dtype).at[:B, :S].set(x.astype(param_dtype))

    vmem_limit = int(min(vmem_cap, max(vmem_estimate(TB) + 8 * 2**20, 32 * 2**20)))
    kernel = _make_kernel(L - 1, half_w)

    def _call(single_buffer: bool):
        in_specs = [pl.BlockSpec((TB, S_pad), lambda i: (i, 0)),      # x tile, pipelined
                    _resident_spec((S_pad, D), single_buffer),         # layer-0 W
                    _resident_spec((1, D), single_buffer)]             # layer-0 b
        args = [x_pad, packed["w0"], packed["b0"]]
        if L > 1:
            in_specs += [_resident_spec((L - 1, D, D), single_buffer),
                         _resident_spec((L - 1, 1, D), single_buffer)]
            args += [packed["w_rest"], packed["b_rest"]]
        in_specs += [_resident_spec((D, out_w), single_buffer),        # fused head W
                     _resident_spec((1, out_w), single_buffer)]        # fused head b
        args += [packed["w_head"], packed["b_head"]]

        return pl.pallas_call(
            kernel,
            out_shape=jax.ShapeDtypeStruct((B_pad, out_w), jnp.float32),
            grid=(B_pad // TB,),
            in_specs=in_specs,
            out_specs=pl.BlockSpec((TB, out_w), lambda i: (i, 0)),
            compiler_params=pltpu.CompilerParams(
                dimension_semantics=("parallel",),     # megacore sharding of batch tiles
                vmem_limit_bytes=vmem_limit,
            ),
        )(*args)

    try:
        out = _call(True)            # single-buffered resident params (saves VMEM on v7x)
    except Exception:
        out = _call(False)           # fallback: default double-buffering

    mu = out[:B, :action_dim]
    std = out[:B, half_w: half_w + action_dim]
    return mu, std


# --------------------------------------------------------------------------- init + references
def init_params(key, state_dim, hidden_layers_dim, action_dim):
    """Synthetic init matching nn.Linear shapes (weights stored [in, out])."""
    params = {"hidden": []}
    dims = [state_dim] + list(hidden_layers_dim)
    for i in range(len(hidden_layers_dim)):
        key, kw, kb = jax.random.split(key, 3)
        bound = 1.0 / jnp.sqrt(dims[i])
        w = jax.random.uniform(kw, (dims[i], dims[i + 1]), jnp.float32, -bound, bound)
        b = jax.random.uniform(kb, (dims[i + 1],), jnp.float32, -bound, bound)
        params["hidden"].append((w, b))

    fan_in = hidden_layers_dim[-1]
    bound = 1.0 / jnp.sqrt(fan_in)
    key, k1, k2, k3, k4 = jax.random.split(key, 5)
    params["mu"] = (
        jax.random.uniform(k1, (fan_in, action_dim), jnp.float32, -bound, bound),
        jax.random.uniform(k2, (action_dim,), jnp.float32, -bound, bound),
    )
    params["std"] = (
        jax.random.uniform(k3, (fan_in, action_dim), jnp.float32, -bound, bound),
        jax.random.uniform(k4, (action_dim,), jnp.float32, -bound, bound),
    )
    return params


def _softplus_torch(z):
    return jnp.where(z > 20.0, z, jnp.log1p(jnp.exp(jnp.minimum(z, 20.0))))


def reference_forward_f32(x, params):
    """Pure-f32 JAX reference of PPOPolicyNet.forward."""
    h = x
    for (w, b) in params["hidden"]:
        h = jnp.maximum(h @ w + b, 0.0)
    mu = jnp.tanh(h @ params["mu"][0] + params["mu"][1])
    std = _softplus_torch(h @ params["std"][0] + params["std"][1]) + 1e-5
    return mu, std


def reference_forward_bf16(x, params):
    """Reference mimicking the kernel's mixed precision (bf16 operands, f32 accumulate)."""
    def mm(a, w):
        return jnp.dot(a.astype(jnp.bfloat16), w.astype(jnp.bfloat16),
                       preferred_element_type=jnp.float32)
    h = x.astype(jnp.float32)
    for (w, b) in params["hidden"]:
        h = jnp.maximum(mm(h, w) + b, 0.0)
    mu = jnp.tanh(mm(h, params["mu"][0]) + params["mu"][1])
    std = _softplus_torch(mm(h, params["std"][0]) + params["std"][1]) + 1e-5
    return mu, std


# --------------------------------------------------------------------------- demo / check
if __name__ == "__main__":
    batch = 2
    state_dim = 16
    hidden_layers_dim = [32, 32]
    action_dim = 4

    key = jax.random.PRNGKey(0)
    key, kx = jax.random.split(key)
    x = jax.random.normal(kx, (batch, state_dim), jnp.float32)
    params = init_params(key, state_dim, hidden_layers_dim, action_dim)

    # --- default fast path: bf16 weights + bf16 input, f32 accumulation/elementwise
    packed = pack_params(params, state_dim)                     # bf16 params
    mu, std = ppo_policy_forward(x, packed)
    mu = jax.block_until_ready(mu)
    std = jax.block_until_ready(std)

    mu_bf, std_bf = reference_forward_bf16(x, params)
    assert jnp.allclose(mu, mu_bf, atol=2e-3, rtol=2e-3), "mean mismatch vs bf16-matched reference"
    assert jnp.allclose(std, std_bf, atol=2e-3, rtol=2e-3), "std mismatch vs bf16-matched reference"

    mu_f, std_f = reference_forward_f32(x, params)
    assert jnp.allclose(mu, mu_f, atol=5e-2, rtol=5e-2), "mean drifted from f32 reference"
    assert jnp.allclose(std, std_f, atol=5e-2, rtol=5e-2), "std drifted from f32 reference"
    assert bool(jnp.all(std > 0.0)), "std must be strictly positive"

    # --- exact-precision path (addresses bf16-rounding concern for PPO log-prob use)
    packed32 = pack_params(params, state_dim, param_dtype=jnp.float32)
    mu32, std32 = ppo_policy_forward(x, packed32)
    mu32 = jax.block_until_ready(mu32)
    std32 = jax.block_until_ready(std32)
    assert jnp.allclose(mu32, mu_f, atol=1e-4, rtol=1e-4), "f32-weight path mean mismatch"
    assert jnp.allclose(std32, std_f, atol=1e-4, rtol=1e-4), "f32-weight path std mismatch"

    print("KERNEL_OK")
</pallas_src>

<mosaic_0001>
module attributes {stable_mosaic.version = 11 : i64} {
  func.func @kernel(%arg0: i32, %arg1: memref<16x128xbf16, #tpu.memory_space<vmem>>, %arg2: memref<128x128xbf16, #tpu.memory_space<vmem>>, %arg3: memref<1x128xf32, #tpu.memory_space<vmem>>, %arg4: memref<1x128x128xbf16, #tpu.memory_space<vmem>>, %arg5: memref<1x1x128xf32, #tpu.memory_space<vmem>>, %arg6: memref<128x128xbf16, #tpu.memory_space<vmem>>, %arg7: memref<1x128xf32, #tpu.memory_space<vmem>>, %arg8: memref<16x128xf32, #tpu.memory_space<vmem>>) attributes {dimension_semantics = [#tpu.dimension_semantics<parallel>], iteration_bounds = array<i64: 1>, scalar_prefetch = 0 : i64, scratch_operands = 0 : i64, tpu.core_type = #tpu.core_type<tc>, window_params = [{transform_indices = @transform_0, window_bounds = array<i64: 16, 128>}, {pipeline_mode = #tpu.pipeline_mode<synchronous>, transform_indices = @transform_1, window_bounds = array<i64: 128, 128>}, {pipeline_mode = #tpu.pipeline_mode<synchronous>, transform_indices = @transform_2, window_bounds = array<i64: 1, 128>}, {pipeline_mode = #tpu.pipeline_mode<synchronous>, transform_indices = @transform_3, window_bounds = array<i64: 1, 128, 128>}, {pipeline_mode = #tpu.pipeline_mode<synchronous>, transform_indices = @transform_4, window_bounds = array<i64: 1, 1, 128>}, {pipeline_mode = #tpu.pipeline_mode<synchronous>, transform_indices = @transform_5, window_bounds = array<i64: 128, 128>}, {pipeline_mode = #tpu.pipeline_mode<synchronous>, transform_indices = @transform_6, window_bounds = array<i64: 1, 128>}, {transform_indices = @transform_7, window_bounds = array<i64: 16, 128>}]} {
    %c0 = arith.constant 0 : index
    %c0_0 = arith.constant 0 : index
    %0 = vector.load %arg1[%c0, %c0_0] : memref<16x128xbf16, #tpu.memory_space<vmem>>, vector<16x128xbf16>
    %c0_1 = arith.constant 0 : index
    %c0_2 = arith.constant 0 : index
    %1 = vector.load %arg2[%c0_1, %c0_2] : memref<128x128xbf16, #tpu.memory_space<vmem>>, vector<128x128xbf16>
    %cst = arith.constant dense<0.000000e+00> : vector<16x128xf32>
    %2 = tpu.matmul %0, %1, %cst {dimension_numbers = #tpu.dot_dimension_numbers<[1], [0], [0], [1], [0, 0, 1, 1], [], []>} : vector<16x128xbf16>, vector<128x128xbf16>, vector<16x128xf32> -> vector<16x128xf32>
    %c0_3 = arith.constant 0 : index
    %c0_4 = arith.constant 0 : index
    %3 = vector.load %arg3[%c0_3, %c0_4] : memref<1x128xf32, #tpu.memory_space<vmem>>, vector<1x128xf32>
    %4 = vector.broadcast %3 : vector<1x128xf32> to vector<16x128xf32>
    %5 = arith.addf %2, %4 : vector<16x128xf32>
    %cst_5 = arith.constant 0.000000e+00 : f32
    %6 = vector.broadcast %cst_5 : f32 to vector<16x128xf32>
    %7 = arith.maximumf %5, %6 : vector<16x128xf32>
    %8 = arith.truncf %7 : vector<16x128xf32> to vector<16x128xbf16>
    %c0_6 = arith.constant 0 : index
    %c0_7 = arith.constant 0 : index
    %c0_8 = arith.constant 0 : index
    %9 = vector.load %arg4[%c0_6, %c0_7, %c0_8] : memref<1x128x128xbf16, #tpu.memory_space<vmem>>, vector<1x128x128xbf16>
    %10 = vector.shape_cast %9 : vector<1x128x128xbf16> to vector<128x128xbf16>
    %cst_9 = arith.constant dense<0.000000e+00> : vector<16x128xf32>
    %11 = tpu.matmul %8, %10, %cst_9 {dimension_numbers = #tpu.dot_dimension_numbers<[1], [0], [0], [1], [0, 0, 1, 1], [], []>} : vector<16x128xbf16>, vector<128x128xbf16>, vector<16x128xf32> -> vector<16x128xf32>
    %c0_10 = arith.constant 0 : index
    %c0_11 = arith.constant 0 : index
    %c0_12 = arith.constant 0 : index
    %12 = vector.load %arg5[%c0_10, %c0_11, %c0_12] : memref<1x1x128xf32, #tpu.memory_space<vmem>>, vector<1x1x128xf32>
    %13 = vector.shape_cast %12 : vector<1x1x128xf32> to vector<1x128xf32>
    %14 = vector.broadcast %13 : vector<1x128xf32> to vector<16x128xf32>
    %15 = arith.addf %11, %14 : vector<16x128xf32>
    %cst_13 = arith.constant 0.000000e+00 : f32
    %16 = vector.broadcast %cst_13 : f32 to vector<16x128xf32>
    %17 = arith.maximumf %15, %16 : vector<16x128xf32>
    %18 = arith.truncf %17 : vector<16x128xf32> to vector<16x128xbf16>
    %c0_14 = arith.constant 0 : index
    %c0_15 = arith.constant 0 : index
    %19 = vector.load %arg6[%c0_14, %c0_15] : memref<128x128xbf16, #tpu.memory_space<vmem>>, vector<128x128xbf16>
    %cst_16 = arith.constant dense<0.000000e+00> : vector<16x128xf32>
    %20 = tpu.matmul %18, %19, %cst_16 {dimension_numbers = #tpu.dot_dimension_numbers<[1], [0], [0], [1], [0, 0, 1, 1], [], []>} : vector<16x128xbf16>, vector<128x128xbf16>, vector<16x128xf32> -> vector<16x128xf32>
    %c0_17 = arith.constant 0 : index
    %c0_18 = arith.constant 0 : index
    %21 = vector.load %arg7[%c0_17, %c0_18] : memref<1x128xf32, #tpu.memory_space<vmem>>, vector<1x128xf32>
    %22 = vector.broadcast %21 : vector<1x128xf32> to vector<16x128xf32>
    %23 = arith.addf %20, %22 : vector<16x128xf32>
    %24 = tpu.iota {dimensions = array<i32: 1>} : vector<16x128xi32>
    %25 = math.tanh %23 : vector<16x128xf32>
    %cst_19 = arith.constant 2.000000e+01 : f32
    %26 = vector.broadcast %cst_19 : f32 to vector<16x128xf32>
    %27 = arith.cmpf ogt, %23, %26 : vector<16x128xf32>
    %cst_20 = arith.constant 2.000000e+01 : f32
    %28 = vector.broadcast %cst_20 : f32 to vector<16x128xf32>
    %29 = arith.minimumf %23, %28 : vector<16x128xf32>
    %30 = math.exp %29 : vector<16x128xf32>
    %31 = math.log1p %30 : vector<16x128xf32>
    %32 = arith.select %27, %23, %31 : vector<16x128xi1>, vector<16x128xf32>
    %cst_21 = arith.constant 9.99999974E-6 : f32
    %33 = vector.broadcast %cst_21 : f32 to vector<16x128xf32>
    %34 = arith.addf %32, %33 : vector<16x128xf32>
    %c64_i32 = arith.constant 64 : i32
    %35 = vector.broadcast %c64_i32 : i32 to vector<16x128xi32>
    %36 = arith.cmpi slt, %24, %35 : vector<16x128xi32>
    %37 = arith.select %36, %25, %34 : vector<16x128xi1>, vector<16x128xf32>
    %c0_22 = arith.constant 0 : index
    %c0_23 = arith.constant 0 : index
    %38 = vector.load %arg8[%c0_22, %c0_23] : memref<16x128xf32, #tpu.memory_space<vmem>>, vector<16x128xf32>
    tpu.vector_store %arg8[%c0_22, %c0_23], %37 {strides = array<i32>} : memref<16x128xf32, #tpu.memory_space<vmem>>, vector<16x128xf32>,
    return
  }
  func.func @transform_0(%arg0: i32) -> (i32, i32) {
    %c0_i32 = arith.constant 0 : i32
    %c0_i32_0 = arith.constant 0 : i32
    return %arg0, %c0_i32 : i32, i32
  }
  func.func @transform_1(%arg0: i32) -> (i32, i32) {
    %c0_i32 = arith.constant 0 : i32
    %c0_i32_0 = arith.constant 0 : i32
    %c0_i32_1 = arith.constant 0 : i32
    return %c0_i32, %c0_i32_0 : i32, i32
  }
  func.func @transform_2(%arg0: i32) -> (i32, i32) {
    %c0_i32 = arith.constant 0 : i32
    %c0_i32_0 = arith.constant 0 : i32
    %c0_i32_1 = arith.constant 0 : i32
    return %c0_i32, %c0_i32_0 : i32, i32
  }
  func.func @transform_3(%arg0: i32) -> (i32, i32, i32) {
    %c0_i32 = arith.constant 0 : i32
    %c0_i32_0 = arith.constant 0 : i32
    %c0_i32_1 = arith.constant 0 : i32
    %c0_i32_2 = arith.constant 0 : i32
    return %c0_i32, %c0_i32_0, %c0_i32_1 : i32, i32, i32
  }
  func.func @transform_4(%arg0: i32) -> (i32, i32, i32) {
    %c0_i32 = arith.constant 0 : i32
    %c0_i32_0 = arith.constant 0 : i32
    %c0_i32_1 = arith.constant 0 : i32
    %c0_i32_2 = arith.constant 0 : i32
    return %c0_i32, %c0_i32_0, %c0_i32_1 : i32, i32, i32
  }
  func.func @transform_5(%arg0: i32) -> (i32, i32) {
    %c0_i32 = arith.constant 0 : i32
    %c0_i32_0 = arith.constant 0 : i32
    %c0_i32_1 = arith.constant 0 : i32
    return %c0_i32, %c0_i32_0 : i32, i32
  }
  func.func @transform_6(%arg0: i32) -> (i32, i32) {
    %c0_i32 = arith.constant 0 : i32
    %c0_i32_0 = arith.constant 0 : i32
    %c0_i32_1 = arith.constant 0 : i32
    return %c0_i32, %c0_i32_0 : i32, i32
  }
  func.func @transform_7(%arg0: i32) -> (i32, i32) {
    %c0_i32 = arith.constant 0 : i32
    %c0_i32_0 = arith.constant 0 : i32
    return %arg0, %c0_i32 : i32, i32
  }
}

module attributes {stable_mosaic.version = 11 : i64} {
  func.func @kernel(%arg0: i32, %arg1: memref<16x128xbf16, #tpu.memory_space<vmem>>, %arg2: memref<128x128xbf16, #tpu.memory_space<vmem>>, %arg3: memref<1x128xf32, #tpu.memory_space<vmem>>, %arg4: memref<1x128x128xbf16, #tpu.memory_space<vmem>>, %arg5: memref<1x1x128xf32, #tpu.memory_space<vmem>>, %arg6: memref<128x128xbf16, #tpu.memory_space<vmem>>, %arg7: memref<1x128xf32, #tpu.memory_space<vmem>>, %arg8: memref<16x128xf32, #tpu.memory_space<vmem>>) attributes {dimension_semantics = [#tpu.dimension_semantics<parallel>], iteration_bounds = array<i64: 1>, scalar_prefetch = 0 : i64, scratch_operands = 0 : i64, tpu.core_type = #tpu.core_type<tc>, window_params = [{transform_indices = @transform_0, window_bounds = array<i64: 16, 128>}, {pipeline_mode = #tpu.pipeline_mode<synchronous>, transform_indices = @transform_1, window_bounds = array<i64: 128, 128>}, {pipeline_mode = #tpu.pipeline_mode<synchronous>, transform_indices = @transform_2, window_bounds = array<i64: 1, 128>}, {pipeline_mode = #tpu.pipeline_mode<synchronous>, transform_indices = @transform_3, window_bounds = array<i64: 1, 128, 128>}, {pipeline_mode = #tpu.pipeline_mode<synchronous>, transform_indices = @transform_4, window_bounds = array<i64: 1, 1, 128>}, {pipeline_mode = #tpu.pipeline_mode<synchronous>, transform_indices = @transform_5, window_bounds = array<i64: 128, 128>}, {pipeline_mode = #tpu.pipeline_mode<synchronous>, transform_indices = @transform_6, window_bounds = array<i64: 1, 128>}, {transform_indices = @transform_7, window_bounds = array<i64: 16, 128>}]} {
    %c0 = arith.constant 0 : index
    %c0_0 = arith.constant 0 : index
    %0 = vector.load %arg1[%c0, %c0_0] : memref<16x128xbf16, #tpu.memory_space<vmem>>, vector<16x128xbf16>
    %c0_1 = arith.constant 0 : index
    %c0_2 = arith.constant 0 : index
    %1 = vector.load %arg2[%c0_1, %c0_2] : memref<128x128xbf16, #tpu.memory_space<vmem>>, vector<128x128xbf16>
    %cst = arith.constant dense<0.000000e+00> : vector<16x128xf32>
    %2 = tpu.matmul %0, %1, %cst {dimension_numbers = #tpu.dot_dimension_numbers<[1], [0], [0], [1], [0, 0, 1, 1], [], []>} : vector<16x128xbf16>, vector<128x128xbf16>, vector<16x128xf32> -> vector<16x128xf32>
    %c0_3 = arith.constant 0 : index
    %c0_4 = arith.constant 0 : index
    %3 = vector.load %arg3[%c0_3, %c0_4] : memref<1x128xf32, #tpu.memory_space<vmem>>, vector<1x128xf32>
    %4 = vector.broadcast %3 : vector<1x128xf32> to vector<16x128xf32>
    %5 = arith.addf %2, %4 : vector<16x128xf32>
    %cst_5 = arith.constant 0.000000e+00 : f32
    %6 = vector.broadcast %cst_5 : f32 to vector<16x128xf32>
    %7 = arith.maximumf %5, %6 : vector<16x128xf32>
    %8 = arith.truncf %7 : vector<16x128xf32> to vector<16x128xbf16>
    %c0_6 = arith.constant 0 : index
    %c0_7 = arith.constant 0 : index
    %c0_8 = arith.constant 0 : index
    %9 = vector.load %arg4[%c0_6, %c0_7, %c0_8] : memref<1x128x128xbf16, #tpu.memory_space<vmem>>, vector<1x128x128xbf16>
    %10 = vector.shape_cast %9 : vector<1x128x128xbf16> to vector<128x128xbf16>
    %cst_9 = arith.constant dense<0.000000e+00> : vector<16x128xf32>
    %11 = tpu.matmul %8, %10, %cst_9 {dimension_numbers = #tpu.dot_dimension_numbers<[1], [0], [0], [1], [0, 0, 1, 1], [], []>} : vector<16x128xbf16>, vector<128x128xbf16>, vector<16x128xf32> -> vector<16x128xf32>
    %c0_10 = arith.constant 0 : index
    %c0_11 = arith.constant 0 : index
    %c0_12 = arith.constant 0 : index
    %12 = vector.load %arg5[%c0_10, %c0_11, %c0_12] : memref<1x1x128xf32, #tpu.memory_space<vmem>>, vector<1x1x128xf32>
    %13 = vector.shape_cast %12 : vector<1x1x128xf32> to vector<1x128xf32>
    %14 = vector.broadcast %13 : vector<1x128xf32> to vector<16x128xf32>
    %15 = arith.addf %11, %14 : vector<16x128xf32>
    %cst_13 = arith.constant 0.000000e+00 : f32
    %16 = vector.broadcast %cst_13 : f32 to vector<16x128xf32>
    %17 = arith.maximumf %15, %16 : vector<16x128xf32>
    %18 = arith.truncf %17 : vector<16x128xf32> to vector<16x128xbf16>
    %c0_14 = arith.constant 0 : index
    %c0_15 = arith.constant 0 : index
    %19 = vector.load %arg6[%c0_14, %c0_15] : memref<128x128xbf16, #tpu.memory_space<vmem>>, vector<128x128xbf16>
    %cst_16 = arith.constant dense<0.000000e+00> : vector<16x128xf32>
    %20 = tpu.matmul %18, %19, %cst_16 {dimension_numbers = #tpu.dot_dimension_numbers<[1], [0], [0], [1], [0, 0, 1, 1], [], []>} : vector<16x128xbf16>, vector<128x128xbf16>, vector<16x128xf32> -> vector<16x128xf32>
    %c0_17 = arith.constant 0 : index
    %c0_18 = arith.constant 0 : index
    %21 = vector.load %arg7[%c0_17, %c0_18] : memref<1x128xf32, #tpu.memory_space<vmem>>, vector<1x128xf32>
    %22 = vector.broadcast %21 : vector<1x128xf32> to vector<16x128xf32>
    %23 = arith.addf %20, %22 : vector<16x128xf32>
    %24 = tpu.iota {dimensions = array<i32: 1>} : vector<16x128xi32>
    %25 = math.tanh %23 : vector<16x128xf32>
    %cst_19 = arith.constant 2.000000e+01 : f32
    %26 = vector.broadcast %cst_19 : f32 to vector<16x128xf32>
    %27 = arith.cmpf ogt, %23, %26 : vector<16x128xf32>
    %cst_20 = arith.constant 2.000000e+01 : f32
    %28 = vector.broadcast %cst_20 : f32 to vector<16x128xf32>
    %29 = arith.minimumf %23, %28 : vector<16x128xf32>
    %30 = math.exp %29 : vector<16x128xf32>
    %31 = math.log1p %30 : vector<16x128xf32>
    %32 = arith.select %27, %23, %31 : vector<16x128xi1>, vector<16x128xf32>
    %cst_21 = arith.constant 9.99999974E-6 : f32
    %33 = vector.broadcast %cst_21 : f32 to vector<16x128xf32>
    %34 = arith.addf %32, %33 : vector<16x128xf32>
    %c64_i32 = arith.constant 64 : i32
    %35 = vector.broadcast %c64_i32 : i32 to vector<16x128xi32>
    %36 = arith.cmpi slt, %24, %35 : vector<16x128xi32>
    %37 = arith.select %36, %25, %34 : vector<16x128xi1>, vector<16x128xf32>
    %c0_22 = arith.constant 0 : index
    %c0_23 = arith.constant 0 : index
    %38 = vector.load %arg8[%c0_22, %c0_23] : memref<16x128xf32, #tpu.memory_space<vmem>>, vector<16x128xf32>
    tpu.vector_store %arg8[%c0_22, %c0_23], %37 {strides = array<i32>} : memref<16x128xf32, #tpu.memory_space<vmem>>, vector<16x128xf32>,
    return
  }
  func.func @transform_0(%arg0: i32) -> (i32, i32) {
    %c0_i32 = arith.constant 0 : i32
    %c0_i32_0 = arith.constant 0 : i32
    return %arg0, %c0_i32 : i32, i32
  }
  func.func @transform_1(%arg0: i32) -> (i32, i32) {
    %c0_i32 = arith.constant 0 : i32
    %c0_i32_0 = arith.constant 0 : i32
    %c0_i32_1 = arith.constant 0 : i32
    return %c0_i32, %c0_i32_0 : i32, i32
  }
  func.func @transform_2(%arg0: i32) -> (i32, i32) {
    %c0_i32 = arith.constant 0 : i32
    %c0_i32_0 = arith.constant 0 : i32
    %c0_i32_1 = arith.constant 0 : i32
    return %c0_i32, %c0_i32_0 : i32, i32
  }
  func.func @transform_3(%arg0: i32) -> (i32, i32, i32) {
    %c0_i32 = arith.constant 0 : i32
    %c0_i32_0 = arith.constant 0 : i32
    %c0_i32_1 = arith.constant 0 : i32
    %c0_i32_2 = arith.constant 0 : i32
    return %c0_i32, %c0_i32_0, %c0_i32_1 : i32, i32, i32
  }
  func.func @transform_4(%arg0: i32) -> (i32, i32, i32) {
    %c0_i32 = arith.constant 0 : i32
    %c0_i32_0 = arith.constant 0 : i32
    %c0_i32_1 = arith.constant 0 : i32
    %c0_i32_2 = arith.constant 0 : i32
    return %c0_i32, %c0_i32_0, %c0_i32_1 : i32, i32, i32
  }
  func.func @transform_5(%arg0: i32) -> (i32, i32) {
    %c0_i32 = arith.constant 0 : i32
    %c0_i32_0 = arith.constant 0 : i32
    %c0_i32_1 = arith.constant 0 : i32
    return %c0_i32, %c0_i32_0 : i32, i32
  }
  func.func @transform_6(%arg0: i32) -> (i32, i32) {
    %c0_i32 = arith.constant 0 : i32
    %c0_i32_0 = arith.constant 0 : i32
    %c0_i32_1 = arith.constant 0 : i32
    return %c0_i32, %c0_i32_0 : i32, i32
  }
  func.func @transform_7(%arg0: i32) -> (i32, i32) {
    %c0_i32 = arith.constant 0 : i32
    %c0_i32_0 = arith.constant 0 : i32
    return %arg0, %c0_i32 : i32, i32
  }
}

</mosaic_0001>

<llo_original>
// kernel: tpu_custom_call.1
$region0: #{tpu_custom_call.1}
  #allocation0 [shape = 'u32[]', space=smem, size = 0x4, offset = 0x4, fixed_abs, tag = 'smem constant byte address 0x4 - core index']
  #allocation1 [shape = 'u32[144,128]{1,0:T(1,128)}', space=vmem, size = 0x12000, scoped, tag = 'internal scratch']
  %s0 = inlined_call_operand.hbm [shape: bf16[16,128], index: 0, kind: input, shape index: {}]
  %s1 = inlined_call_operand.hbm [shape: bf16[128,128], index: 1, kind: input, shape index: {}]
  %s2 = inlined_call_operand.vmem [shape: f32[1,128], index: 2, kind: input, shape index: {}]
  %s3 = inlined_call_operand.hbm [shape: bf16[1,128,128], index: 3, kind: input, shape index: {}]
  %s4 = inlined_call_operand.vmem [shape: f32[1,1,128], index: 4, kind: input, shape index: {}]
  %s5 = inlined_call_operand.hbm [shape: bf16[128,128], index: 5, kind: input, shape index: {}]
  %s6 = inlined_call_operand.vmem [shape: f32[1,128], index: 6, kind: input, shape index: {}]
  %s7 = inlined_call_operand.hbm [shape: f32[16,128], index: 7, kind: output, shape index: {}]
  %s8 = sld [smem:[#allocation0]]
  $region54: #{tpu_custom_call.1} parent=0
    _
  %s10 = ssub.s32 1, %s8
  %s11 = scalar_select 0, %s10, %s8
  $region1: #{tpu_custom_call.1} parent=0
    #allocation2 [shape = 'u8[4096]{0}', space=vmem, size = 0x1000, scoped, tag = 'input window, operand 0, single buffered']
    #allocation3 [shape = 's32[1]{0}', space=sflag, size = 0x4, scoped, tag = 'scoped memory for tpu_custom_call.1']
    #allocation4 [shape = 's32[1]{0}', space=sflag, size = 0x4, scoped, tag = 'scoped memory for tpu_custom_call.1']
    #allocation5 [shape = 'u8[32768]{0}', space=vmem, size = 0x8000, scoped, tag = 'input window, operand 1, single buffered']
    #allocation6 [shape = 's32[1]{0}', space=sflag, size = 0x4, scoped, tag = 'scoped memory for tpu_custom_call.1']
    #allocation7 [shape = 'u8[32768]{0}', space=vmem, size = 0x8000, scoped, tag = 'input window, operand 3, single buffered']
    #allocation8 [shape = 'u8[32768]{0}', space=vmem, size = 0x8000, scoped, tag = 'input window, operand 5, single buffered']
    #allocation9 [shape = 's32[1]{0}', space=sflag, size = 0x4, scoped, tag = 'scoped memory for tpu_custom_call.1']
    #allocation10 [shape = 'u8[8192]{0}', space=vmem, size = 0x2000, scoped, tag = 'output window, operand 0, single buffered']
    %12 = vsyncpa [#allocation3], 0
    %13 = vsyncpa [#allocation6], 0
    %14 = vsyncpa [#allocation9], 0
    %15 = vsyncpa [#allocation4], 0
    // Predicated region
    $region2: #{tpu_custom_call.1} parent=1 // pred_check
      _
    $region3: #{tpu_custom_call.1} parent=1 // pred_check_branch
      %17 = sbr.rel (0) target = $region5
    $region4: #{tpu_custom_call.1} parent=1 // pred_region
      %s19 = ssub.s32 128, 128
      %20 = vsyncadd [#allocation3], %s19
      %s21 = sshll.u32 [#allocation2], 4
      %s22 = int_to_ptr.vmem [resolvable:$true] %s21
      %27 = dma.hbm_to_vmem [thread:$0]  %s0, 128, %s22, [#allocation3], 64, 64, 4
    $region5: #{tpu_custom_call.1} parent=1 // pred_fallthru
      _
    // Predicated region
    $region6: #{tpu_custom_call.1} parent=1 // pred_check
      _
    $region7: #{tpu_custom_call.1} parent=1 // pred_check_branch
      %29 = sbr.rel (0) target = $region9
    $region8: #{tpu_custom_call.1} parent=1 // pred_region
      %s31 = ssub.s32 1024, 1024
      %32 = vsyncadd [#allocation6], %s31
      %s33 = sshll.u32 [#allocation5], 4
      %s34 = int_to_ptr.vmem [resolvable:$true] %s33
      %39 = dma.hbm_to_vmem [thread:$0]  %s1, 1024, %s34, [#allocation6], 64, 64, 4
    $region9: #{tpu_custom_call.1} parent=1 // pred_fallthru
      _
    // Predicated region
    $region10: #{tpu_custom_call.1} parent=1 // pred_check
      _
    $region11: #{tpu_custom_call.1} parent=1 // pred_check_branch
      %41 = sbr.rel (0) target = $region13
    $region12: #{tpu_custom_call.1} parent=1 // pred_region
      _
    $region13: #{tpu_custom_call.1} parent=1 // pred_fallthru
      _
    // Predicated region
    $region14: #{tpu_custom_call.1} parent=1 // pred_check
      _
    $region15: #{tpu_custom_call.1} parent=1 // pred_check_branch
      %43 = sbr.rel (0) target = $region17
    $region16: #{tpu_custom_call.1} parent=1 // pred_region
      %s45 = ssub.s32 1024, 1024
      %46 = vsyncadd [#allocation6], %s45
      %s47 = sshll.u32 [#allocation7], 4
      %s48 = int_to_ptr.vmem [resolvable:$true] %s47
      %53 = dma.hbm_to_vmem [thread:$0]  %s3, 1024, %s48, [#allocation6], 64, 64, 4
    $region17: #{tpu_custom_call.1} parent=1 // pred_fallthru
      _
    // Predicated region
    $region18: #{tpu_custom_call.1} parent=1 // pred_check
      _
    $region19: #{tpu_custom_call.1} parent=1 // pred_check_branch
      %55 = sbr.rel (0) target = $region21
    $region20: #{tpu_custom_call.1} parent=1 // pred_region
      _
    $region21: #{tpu_custom_call.1} parent=1 // pred_fallthru
      _
    // Predicated region
    $region22: #{tpu_custom_call.1} parent=1 // pred_check
      _
    $region23: #{tpu_custom_call.1} parent=1 // pred_check_branch
      %57 = sbr.rel (0) target = $region25
    $region24: #{tpu_custom_call.1} parent=1 // pred_region
      %s59 = ssub.s32 1024, 1024
      %60 = vsyncadd [#allocation9], %s59
      %s61 = sshll.u32 [#allocation8], 4
      %s62 = int_to_ptr.vmem [resolvable:$true] %s61
      %67 = dma.hbm_to_vmem [thread:$0]  %s5, 1024, %s62, [#allocation9], 64, 64, 4
    $region25: #{tpu_custom_call.1} parent=1 // pred_fallthru
      _
    // Predicated region
    $region26: #{tpu_custom_call.1} parent=1 // pred_check
      _
    $region27: #{tpu_custom_call.1} parent=1 // pred_check_branch
      %69 = sbr.rel (0) target = $region29
    $region28: #{tpu_custom_call.1} parent=1 // pred_region
      _
    $region29: #{tpu_custom_call.1} parent=1 // pred_fallthru
      _
    // Predicated region
    $region30: #{tpu_custom_call.1} parent=1 // pred_check
      _
    $region31: #{tpu_custom_call.1} parent=1 // pred_check_branch
      %71 = sbr.rel (0) target = $region33
    $region32: #{tpu_custom_call.1} parent=1 // pred_region
      %72 = dma.done [#allocation3], 128
    $region33: #{tpu_custom_call.1} parent=1 // pred_fallthru
      _
    // Predicated region
    $region34: #{tpu_custom_call.1} parent=1 // pred_check
      _
    $region35: #{tpu_custom_call.1} parent=1 // pred_check_branch
      %74 = sbr.rel (0) target = $region37
    $region36: #{tpu_custom_call.1} parent=1 // pred_region
      %75 = dma.done [#allocation6], 1024
    $region37: #{tpu_custom_call.1} parent=1 // pred_fallthru
      _
    // Predicated region
    $region38: #{tpu_custom_call.1} parent=1 // pred_check
      _
    $region39: #{tpu_custom_call.1} parent=1 // pred_check_branch
      %77 = sbr.rel (0) target = $region41
    $region40: #{tpu_custom_call.1} parent=1 // pred_region
      %78 = dma.done [#allocation6], 1024
    $region41: #{tpu_custom_call.1} parent=1 // pred_fallthru
      _
    // Predicated region
    $region42: #{tpu_custom_call.1} parent=1 // pred_check
      _
    $region43: #{tpu_custom_call.1} parent=1 // pred_check_branch
      %80 = sbr.rel (0) target = $region45
    $region44: #{tpu_custom_call.1} parent=1 // pred_region
      %81 = dma.done [#allocation9], 1024
    $region45: #{tpu_custom_call.1} parent=1 // pred_fallthru
      _
    %v83 = vld [vmem:[#allocation2] sm:$0xf]
    %v84 = vld [vmem:[#allocation2 + $0x4] sm:$0xf]
    %v85 = vld [vmem:[#allocation5] sm:$0xf]
    %v86 = vld [vmem:[#allocation5 + $0x4] sm:$0xf]
    %v87 = vld [vmem:[#allocation5 + $0x8] sm:$0xf]
    %v88 = vld [vmem:[#allocation5 + $0xc] sm:$0xf]
    %v89 = vld [vmem:[#allocation5 + $0x10] sm:$0xf]
    %v90 = vld [vmem:[#allocation5 + $0x14] sm:$0xf]
    %v91 = vld [vmem:[#allocation5 + $0x18] sm:$0xf]
    %v92 = vld [vmem:[#allocation5 + $0x1c] sm:$0xf]
    %v93 = vld [vmem:[#allocation5 + $0x20] sm:$0xf]
    %v94 = vld [vmem:[#allocation5 + $0x24] sm:$0xf]
    %v95 = vld [vmem:[#allocation5 + $0x28] sm:$0xf]
    %v96 = vld [vmem:[#allocation5 + $0x2c] sm:$0xf]
    %v97 = vld [vmem:[#allocation5 + $0x30] sm:$0xf]
    %v98 = vld [vmem:[#allocation5 + $0x34] sm:$0xf]
    %v99 = vld [vmem:[#allocation5 + $0x38] sm:$0xf]
    %v100 = vld [vmem:[#allocation5 + $0x3c] sm:$0xf]
    %v101 = vld [vmem:[%s2] sm:$0x1]
    %v103 = vlaneseq
    %v104 = vshrl.u32 %v103, 7
    %v105 = vsub.s32 0, %v104
    %v106 = vrot.slane %v101, %v105
    %v110 = vunpack.c.l.b16 %v83
    %v111 = vunpack.c.l.b16 %v84
    %v112 = vpack.c.b16 %v111, %v110
    %v130 = vunpack.c.l.b16 %v85
    %v131 = vunpack.c.l.b16 %v86
    %v132 = vunpack.c.l.b16 %v87
    %v133 = vunpack.c.l.b16 %v88
    %v134 = vunpack.c.l.b16 %v89
    %v135 = vunpack.c.l.b16 %v90
    %v136 = vunpack.c.l.b16 %v91
    %v137 = vunpack.c.l.b16 %v92
    %v138 = vunpack.c.l.b16 %v93
    %v139 = vunpack.c.l.b16 %v94
    %v140 = vunpack.c.l.b16 %v95
    %v141 = vunpack.c.l.b16 %v96
    %v142 = vunpack.c.l.b16 %v97
    %v143 = vunpack.c.l.b16 %v98
    %v144 = vunpack.c.l.b16 %v99
    %v145 = vunpack.c.l.b16 %v100
    %v146 = vpack.c.b16 %v131, %v130
    %v147 = vpack.c.b16 %v133, %v132
    %v148 = vpack.c.b16 %v135, %v134
    %v149 = vpack.c.b16 %v137, %v136
    %v150 = vpack.c.b16 %v139, %v138
    %v151 = vpack.c.b16 %v141, %v140
    %v152 = vpack.c.b16 %v143, %v142
    %v153 = vpack.c.b16 %v145, %v144
    %162 = vmatprep.subr.bf16.mxu0 0
    %163 = vmatpush1.bf16.msra.mxu0 %v146
    %164 = vmatprep.subr.bf16.mxu0 0
    %165 = vmatpush1.bf16.msra.mxu0 %v147
    %166 = vmatprep.subr.bf16.mxu0 0
    %167 = vmatpush1.bf16.msra.mxu0 %v148
    %168 = vmatprep.subr.bf16.mxu0 0
    %169 = vmatpush1.bf16.msra.mxu0 %v149
    %170 = vmatprep.subr.bf16.mxu0 0
    %171 = vmatpush1.bf16.msra.mxu0 %v150
    %172 = vmatprep.subr.bf16.mxu0 0
    %173 = vmatpush1.bf16.msra.mxu0 %v151
    %174 = vmatprep.subr.bf16.mxu0 0
    %175 = vmatpush1.bf16.msra.mxu0 %v152
    %176 = vmatprep.subr.bf16.mxu0 0
    %177 = vmatpush1.bf16.msra.mxu0 %v153
    %178 = vmatprep.subr.bf16.mxu0 0
    %179 = vmatpush1.bf16.msra.mxu0 0
    %180 = vmatprep.subr.bf16.mxu0 0
    %181 = vmatpush1.bf16.msra.mxu0 0
    %182 = vmatprep.subr.bf16.mxu0 0
    %183 = vmatpush1.bf16.msra.mxu0 0
    %184 = vmatprep.subr.bf16.mxu0 0
    %185 = vmatpush1.bf16.msra.mxu0 0
    %186 = vmatprep.subr.bf16.mxu0 0
    %187 = vmatpush1.bf16.msra.mxu0 0
    %188 = vmatprep.subr.bf16.mxu0 0
    %189 = vmatpush1.bf16.msra.mxu0 0
    %190 = vmatprep.subr.bf16.mxu0 0
    %191 = vmatpush1.bf16.msra.mxu0 0
    %192 = vmatprep.subr.bf16.mxu0 0
    %193 = vmatpush1.bf16.msra.mxu0 0
    %194 = vmatprep.mubr.bf16.mxu0 0
    %195 = vmatmul.mubr.bf16.gmra.mrb[0].mxu0 %v112
    %v196 = vpop.f32.mrb[0].mxu0
    %v197 = vadd.f32 %v106, %v196
    %v198 = vpop.f32.mrb[0].mxu0
    %v199 = vpop.f32.mrb[0].mxu0
    %v200 = vadd.f32 %v106, %v199
    %v201 = vpop.f32.mrb[0].mxu0
    %202 = vdwg.mxu0
    %v203 = vmax.f32 %v197, 0.0
    %v204 = vmax.f32 %v200, 0.0
    %v205 = vpack.c.bf16 %v204, %v203
    %v206 = vld [vmem:[#allocation7] sm:$0xf]
    %v207 = vld [vmem:[#allocation7 + $0x4] sm:$0xf]
    %v208 = vld [vmem:[#allocation7 + $0x8] sm:$0xf]
    %v209 = vld [vmem:[#allocation7 + $0xc] sm:$0xf]
    %v210 = vld [vmem:[#allocation7 + $0x10] sm:$0xf]
    %v211 = vld [vmem:[#allocation7 + $0x14] sm:$0xf]
    %v212 = vld [vmem:[#allocation7 + $0x18] sm:$0xf]
    %v213 = vld [vmem:[#allocation7 + $0x1c] sm:$0xf]
    %v214 = vld [vmem:[#allocation7 + $0x20] sm:$0xf]
    %v215 = vld [vmem:[#allocation7 + $0x24] sm:$0xf]
    %v216 = vld [vmem:[#allocation7 + $0x28] sm:$0xf]
    %v217 = vld [vmem:[#allocation7 + $0x2c] sm:$0xf]
    %v218 = vld [vmem:[#allocation7 + $0x30] sm:$0xf]
    %v219 = vld [vmem:[#allocation7 + $0x34] sm:$0xf]
    %v220 = vld [vmem:[#allocation7 + $0x38] sm:$0xf]
    %v221 = vld [vmem:[#allocation7 + $0x3c] sm:$0xf]
    %v222 = vld [vmem:[%s4] sm:$0x1]
    %v224 = vlaneseq
    %v225 = vshrl.u32 %v224, 7
    %v226 = vsub.s32 0, %v225
    %v227 = vrot.slane %v222, %v226
    %v245 = vunpack.c.l.b16 %v206
    %v246 = vunpack.c.l.b16 %v207
    %v247 = vunpack.c.l.b16 %v208
    %v248 = vunpack.c.l.b16 %v209
    %v249 = vunpack.c.l.b16 %v210
    %v250 = vunpack.c.l.b16 %v211
    %v251 = vunpack.c.l.b16 %v212
    %v252 = vunpack.c.l.b16 %v213
    %v253 = vunpack.c.l.b16 %v214
    %v254 = vunpack.c.l.b16 %v215
    %v255 = vunpack.c.l.b16 %v216
    %v256 = vunpack.c.l.b16 %v217
    %v257 = vunpack.c.l.b16 %v218
    %v258 = vunpack.c.l.b16 %v219
    %v259 = vunpack.c.l.b16 %v220
    %v260 = vunpack.c.l.b16 %v221
    %v261 = vpack.c.b16 %v246, %v245
    %v262 = vpack.c.b16 %v248, %v247
    %v263 = vpack.c.b16 %v250, %v249
    %v264 = vpack.c.b16 %v252, %v251
    %v265 = vpack.c.b16 %v254, %v253
    %v266 = vpack.c.b16 %v256, %v255
    %v267 = vpack.c.b16 %v258, %v257
    %v268 = vpack.c.b16 %v260, %v259
    %277 = vmatprep.subr.bf16.mxu0 0
    %278 = vmatpush1.bf16.msra.mxu0 %v261
    %279 = vmatprep.subr.bf16.mxu0 0
    %280 = vmatpush1.bf16.msra.mxu0 %v262
    %281 = vmatprep.subr.bf16.mxu0 0
    %282 = vmatpush1.bf16.msra.mxu0 %v263
    %283 = vmatprep.subr.bf16.mxu0 0
    %284 = vmatpush1.bf16.msra.mxu0 %v264
    %285 = vmatprep.subr.bf16.mxu0 0
    %286 = vmatpush1.bf16.msra.mxu0 %v265
    %287 = vmatprep.subr.bf16.mxu0 0
    %288 = vmatpush1.bf16.msra.mxu0 %v266
    %289 = vmatprep.subr.bf16.mxu0 0
    %290 = vmatpush1.bf16.msra.mxu0 %v267
    %291 = vmatprep.subr.bf16.mxu0 0
    %292 = vmatpush1.bf16.msra.mxu0 %v268
    %293 = vmatprep.subr.bf16.mxu0 0
    %294 = vmatpush1.bf16.msra.mxu0 0
    %295 = vmatprep.subr.bf16.mxu0 0
    %296 = vmatpush1.bf16.msra.mxu0 0
    %297 = vmatprep.subr.bf16.mxu0 0
    %298 = vmatpush1.bf16.msra.mxu0 0
    %299 = vmatprep.subr.bf16.mxu0 0
    %300 = vmatpush1.bf16.msra.mxu0 0
    %301 = vmatprep.subr.bf16.mxu0 0
    %302 = vmatpush1.bf16.msra.mxu0 0
    %303 = vmatprep.subr.bf16.mxu0 0
    %304 = vmatpush1.bf16.msra.mxu0 0
    %305 = vmatprep.subr.bf16.mxu0 0
    %306 = vmatpush1.bf16.msra.mxu0 0
    %307 = vmatprep.subr.bf16.mxu0 0
    %308 = vmatpush1.bf16.msra.mxu0 0
    %309 = vmatprep.mubr.bf16.mxu0 0
    %310 = vmatmul.mubr.bf16.gmra.mrb[0].mxu0 %v205
    %v311 = vpop.f32.mrb[0].mxu0
    %v312 = vadd.f32 %v227, %v311
    %v313 = vpop.f32.mrb[0].mxu0
    %v314 = vpop.f32.mrb[0].mxu0
    %v315 = vadd.f32 %v227, %v314
    %v316 = vpop.f32.mrb[0].mxu0
    %317 = vdwg.mxu0
    %v318 = vmax.f32 %v312, 0.0
    %v319 = vmax.f32 %v315, 0.0
    %v320 = vpack.c.bf16 %v319, %v318
    %v321 = vld [vmem:[#allocation8] sm:$0xf]
    %v322 = vld [vmem:[#allocation8 + $0x4] sm:$0xf]
    %v323 = vld [vmem:[#allocation8 + $0x8] sm:$0xf]
    %v324 = vld [vmem:[#allocation8 + $0xc] sm:$0xf]
    %v325 = vld [vmem:[#allocation8 + $0x10] sm:$0xf]
    %v326 = vld [vmem:[#allocation8 + $0x14] sm:$0xf]
    %v327 = vld [vmem:[#allocation8 + $0x18] sm:$0xf]
    %v328 = vld [vmem:[#allocation8 + $0x1c] sm:$0xf]
    %v329 = vld [vmem:[#allocation8 + $0x20] sm:$0xf]
    %v330 = vld [vmem:[#allocation8 + $0x24] sm:$0xf]
    %v331 = vld [vmem:[#allocation8 + $0x28] sm:$0xf]
    %v332 = vld [vmem:[#allocation8 + $0x2c] sm:$0xf]
    %v333 = vld [vmem:[#allocation8 + $0x30] sm:$0xf]
    %v334 = vld [vmem:[#allocation8 + $0x34] sm:$0xf]
    %v335 = vld [vmem:[#allocation8 + $0x38] sm:$0xf]
    %v336 = vld [vmem:[#allocation8 + $0x3c] sm:$0xf]
    %v337 = vld [vmem:[%s6] sm:$0x1]
    %v339 = vlaneseq
    %v340 = vshrl.u32 %v339, 7
    %v341 = vsub.s32 0, %v340
    %v342 = vrot.slane %v337, %v341
    %v360 = vunpack.c.l.b16 %v321
    %v361 = vunpack.c.l.b16 %v322
    %v362 = vunpack.c.l.b16 %v323
    %v363 = vunpack.c.l.b16 %v324
    %v364 = vunpack.c.l.b16 %v325
    %v365 = vunpack.c.l.b16 %v326
    %v366 = vunpack.c.l.b16 %v327
    %v367 = vunpack.c.l.b16 %v328
    %v368 = vunpack.c.l.b16 %v329
    %v369 = vunpack.c.l.b16 %v330
    %v370 = vunpack.c.l.b16 %v331
    %v371 = vunpack.c.l.b16 %v332
    %v372 = vunpack.c.l.b16 %v333
    %v373 = vunpack.c.l.b16 %v334
    %v374 = vunpack.c.l.b16 %v335
    %v375 = vunpack.c.l.b16 %v336
    %v376 = vpack.c.b16 %v361, %v360
    %v377 = vpack.c.b16 %v363, %v362
    %v378 = vpack.c.b16 %v365, %v364
    %v379 = vpack.c.b16 %v367, %v366
    %v380 = vpack.c.b16 %v369, %v368
    %v381 = vpack.c.b16 %v371, %v370
    %v382 = vpack.c.b16 %v373, %v372
    %v383 = vpack.c.b16 %v375, %v374
    %392 = vmatprep.subr.bf16.mxu0 0
    %393 = vmatpush1.bf16.msra.mxu0 %v376
    %394 = vmatprep.subr.bf16.mxu0 0
    %395 = vmatpush1.bf16.msra.mxu0 %v377
    %396 = vmatprep.subr.bf16.mxu0 0
    %397 = vmatpush1.bf16.msra.mxu0 %v378
    %398 = vmatprep.subr.bf16.mxu0 0
    %399 = vmatpush1.bf16.msra.mxu0 %v379
    %400 = vmatprep.subr.bf16.mxu0 0
    %401 = vmatpush1.bf16.msra.mxu0 %v380
    %402 = vmatprep.subr.bf16.mxu0 0
    %403 = vmatpush1.bf16.msra.mxu0 %v381
    %404 = vmatprep.subr.bf16.mxu0 0
    %405 = vmatpush1.bf16.msra.mxu0 %v382
    %406 = vmatprep.subr.bf16.mxu0 0
    %407 = vmatpush1.bf16.msra.mxu0 %v383
    %408 = vmatprep.subr.bf16.mxu0 0
    %409 = vmatpush1.bf16.msra.mxu0 0
    %410 = vmatprep.subr.bf16.mxu0 0
    %411 = vmatpush1.bf16.msra.mxu0 0
    %412 = vmatprep.subr.bf16.mxu0 0
    %413 = vmatpush1.bf16.msra.mxu0 0
    %414 = vmatprep.subr.bf16.mxu0 0
    %415 = vmatpush1.bf16.msra.mxu0 0
    %416 = vmatprep.subr.bf16.mxu0 0
    %417 = vmatpush1.bf16.msra.mxu0 0
    %418 = vmatprep.subr.bf16.mxu0 0
    %419 = vmatpush1.bf16.msra.mxu0 0
    %420 = vmatprep.subr.bf16.mxu0 0
    %421 = vmatpush1.bf16.msra.mxu0 0
    %422 = vmatprep.subr.bf16.mxu0 0
    %423 = vmatpush1.bf16.msra.mxu0 0
    %424 = vmatprep.mubr.bf16.mxu0 0
    %425 = vmatmul.mubr.bf16.gmra.mrb[0].mxu0 %v320
    %v426 = vpop.f32.mrb[0].mxu0
    %v427 = vadd.f32 %v342, %v426
    %v428 = vpop.f32.mrb[0].mxu0
    %v429 = vpop.f32.mrb[0].mxu0
    %v430 = vadd.f32 %v342, %v429
    %v431 = vpop.f32.mrb[0].mxu0
    %432 = vdwg.mxu0
    %v433 = vlaneseq
    %v434 = vand.u32 %v433, 127
    %v435 = vtanh.pop %v427
    %v436 = vtanh.pop %v430
    %vm437 = vcmp.gt.f32.partialorder %v427, 20.0
    %vm438 = vcmp.gt.f32.partialorder %v430, 20.0
    %v439 = vmin.f32 %v427, 20.0
    %v440 = vmin.f32 %v430, 20.0
    %v441 = vmul.f32 %v439, 1.442695
    %v442 = vpow.pop %v441
    %v443 = vmul.f32 %v440, 1.442695
    %v444 = vpow.pop %v443
    %v445 = vadd.f32 %v442, 1.0
    %v446 = vlog2.pop %v445
    %v447 = vmul.f32 %v446, 0.6931472
    %v448 = vmul.f32 -0.5, %v442
    %v449 = vadd.f32 %v448, 1.0
    %v450 = vmul.f32 %v449, %v442
    %v451 = vand.u32 2147483647, %v442
    %vm452 = vcmp.lt.f32.partialorder %v451, 0.0004427343
    %v453 = vsel %vm452, %v450, %v447
    %v454 = vadd.f32 %v444, 1.0
    %v455 = vlog2.pop %v454
    %v456 = vmul.f32 %v455, 0.6931472
    %v457 = vmul.f32 -0.5, %v444
    %v458 = vadd.f32 %v457, 1.0
    %v459 = vmul.f32 %v458, %v444
    %v460 = vand.u32 2147483647, %v444
    %vm461 = vcmp.lt.f32.partialorder %v460, 0.0004427343
    %v462 = vsel %vm461, %v459, %v456
    %v463 = vsel %vm437, %v427, %v453
    %v464 = vsel %vm438, %v430, %v462
    %v465 = vadd.f32 %v463, 1e-05
    %v466 = vadd.f32 %v464, 1e-05
    %vm467 = vcmp.lt.s32.totalorder %v434, 64
    %v468 = vsel %vm467, %v435, %v465
    %v469 = vsel %vm467, %v436, %v466
    %470 = vst [vmem:[#allocation10] sm:$0xff] %v468
    %471 = vst [vmem:[#allocation10 + $0x8] sm:$0xff] %v469
    // Predicated region
    $region46: #{tpu_custom_call.1} parent=1 // pred_check
      _
    $region47: #{tpu_custom_call.1} parent=1 // pred_check_branch
      %473 = sbr.rel (0) target = $region49
    $region48: #{tpu_custom_call.1} parent=1 // pred_region
      %s475 = ssub.s32 256, 256
      %476 = vsyncadd [#allocation4], %s475
      %s477 = sshll.u32 [#allocation10], 4
      %s478 = int_to_ptr.vmem [resolvable:$true] %s477
      %483 = dma.vmem_to_hbm [thread:$0]  %s478, 256, %s7, [#allocation4], 128, 128, 8
    $region49: #{tpu_custom_call.1} parent=1 // pred_fallthru
      _
    // Predicated region
    $region50: #{tpu_custom_call.1} parent=1 // pred_check
      _
    $region51: #{tpu_custom_call.1} parent=1 // pred_check_branch
      %485 = sbr.rel (0) target = $region53
    $region52: #{tpu_custom_call.1} parent=1 // pred_region
      %486 = dma.done [#allocation4], 256
    $region53: #{tpu_custom_call.1} parent=1 // pred_fallthru
      _
    %487 = vsyncpa [#allocation3], 1
    %488 = vsyncpa [#allocation6], 1
    %489 = vsyncpa [#allocation9], 1
    %490 = vsyncpa [#allocation4], 1

// kernel: tpu_custom_call.1
$region0: #{tpu_custom_call.1}
  #allocation0 [shape = 'u32[]', space=smem, size = 0x4, offset = 0x4, fixed_abs, tag = 'smem constant byte address 0x4 - core index']
  #allocation1 [shape = 'u32[144,128]{1,0:T(1,128)}', space=vmem, size = 0x12000, scoped, tag = 'internal scratch']
  %s0 = inlined_call_operand.hbm [shape: bf16[16,128], index: 0, kind: input, shape index: {}]
  %s1 = inlined_call_operand.hbm [shape: bf16[128,128], index: 1, kind: input, shape index: {}]
  %s2 = inlined_call_operand.vmem [shape: f32[1,128], index: 2, kind: input, shape index: {}]
  %s3 = inlined_call_operand.hbm [shape: bf16[1,128,128], index: 3, kind: input, shape index: {}]
  %s4 = inlined_call_operand.vmem [shape: f32[1,1,128], index: 4, kind: input, shape index: {}]
  %s5 = inlined_call_operand.hbm [shape: bf16[128,128], index: 5, kind: input, shape index: {}]
  %s6 = inlined_call_operand.vmem [shape: f32[1,128], index: 6, kind: input, shape index: {}]
  %s7 = inlined_call_operand.hbm [shape: f32[16,128], index: 7, kind: output, shape index: {}]
  %s8 = sld [smem:[#allocation0]]
  $region54: #{tpu_custom_call.1} parent=0
    _
  %s10 = ssub.s32 1, %s8
  %s11 = scalar_select 0, %s10, %s8
  $region1: #{tpu_custom_call.1} parent=0
    #allocation2 [shape = 'u8[4096]{0}', space=vmem, size = 0x1000, scoped, tag = 'input window, operand 0, single buffered']
    #allocation3 [shape = 's32[1]{0}', space=sflag, size = 0x4, scoped, tag = 'scoped memory for tpu_custom_call.1']
    #allocation4 [shape = 's32[1]{0}', space=sflag, size = 0x4, scoped, tag = 'scoped memory for tpu_custom_call.1']
    #allocation5 [shape = 'u8[32768]{0}', space=vmem, size = 0x8000, scoped, tag = 'input window, operand 1, single buffered']
    #allocation6 [shape = 's32[1]{0}', space=sflag, size = 0x4, scoped, tag = 'scoped memory for tpu_custom_call.1']
    #allocation7 [shape = 'u8[32768]{0}', space=vmem, size = 0x8000, scoped, tag = 'input window, operand 3, single buffered']
    #allocation8 [shape = 'u8[32768]{0}', space=vmem, size = 0x8000, scoped, tag = 'input window, operand 5, single buffered']
    #allocation9 [shape = 's32[1]{0}', space=sflag, size = 0x4, scoped, tag = 'scoped memory for tpu_custom_call.1']
    #allocation10 [shape = 'u8[8192]{0}', space=vmem, size = 0x2000, scoped, tag = 'output window, operand 0, single buffered']
    %12 = vsyncpa [#allocation3], 0
    %13 = vsyncpa [#allocation6], 0
    %14 = vsyncpa [#allocation9], 0
    %15 = vsyncpa [#allocation4], 0
    // Predicated region
    $region2: #{tpu_custom_call.1} parent=1 // pred_check
      _
    $region3: #{tpu_custom_call.1} parent=1 // pred_check_branch
      %17 = sbr.rel (0) target = $region5
    $region4: #{tpu_custom_call.1} parent=1 // pred_region
      %s19 = ssub.s32 128, 128
      %20 = vsyncadd [#allocation3], %s19
      %s21 = sshll.u32 [#allocation2], 4
      %s22 = int_to_ptr.vmem [resolvable:$true] %s21
      %27 = dma.hbm_to_vmem [thread:$0]  %s0, 128, %s22, [#allocation3], 64, 64, 4
    $region5: #{tpu_custom_call.1} parent=1 // pred_fallthru
      _
    // Predicated region
    $region6: #{tpu_custom_call.1} parent=1 // pred_check
      _
    $region7: #{tpu_custom_call.1} parent=1 // pred_check_branch
      %29 = sbr.rel (0) target = $region9
    $region8: #{tpu_custom_call.1} parent=1 // pred_region
      %s31 = ssub.s32 1024, 1024
      %32 = vsyncadd [#allocation6], %s31
      %s33 = sshll.u32 [#allocation5], 4
      %s34 = int_to_ptr.vmem [resolvable:$true] %s33
      %39 = dma.hbm_to_vmem [thread:$0]  %s1, 1024, %s34, [#allocation6], 64, 64, 4
    $region9: #{tpu_custom_call.1} parent=1 // pred_fallthru
      _
    // Predicated region
    $region10: #{tpu_custom_call.1} parent=1 // pred_check
      _
    $region11: #{tpu_custom_call.1} parent=1 // pred_check_branch
      %41 = sbr.rel (0) target = $region13
    $region12: #{tpu_custom_call.1} parent=1 // pred_region
      _
    $region13: #{tpu_custom_call.1} parent=1 // pred_fallthru
      _
    // Predicated region
    $region14: #{tpu_custom_call.1} parent=1 // pred_check
      _
    $region15: #{tpu_custom_call.1} parent=1 // pred_check_branch
      %43 = sbr.rel (0) target = $region17
    $region16: #{tpu_custom_call.1} parent=1 // pred_region
      %s45 = ssub.s32 1024, 1024
      %46 = vsyncadd [#allocation6], %s45
      %s47 = sshll.u32 [#allocation7], 4
      %s48 = int_to_ptr.vmem [resolvable:$true] %s47
      %53 = dma.hbm_to_vmem [thread:$0]  %s3, 1024, %s48, [#allocation6], 64, 64, 4
    $region17: #{tpu_custom_call.1} parent=1 // pred_fallthru
      _
    // Predicated region
    $region18: #{tpu_custom_call.1} parent=1 // pred_check
      _
    $region19: #{tpu_custom_call.1} parent=1 // pred_check_branch
      %55 = sbr.rel (0) target = $region21
    $region20: #{tpu_custom_call.1} parent=1 // pred_region
      _
    $region21: #{tpu_custom_call.1} parent=1 // pred_fallthru
      _
    // Predicated region
    $region22: #{tpu_custom_call.1} parent=1 // pred_check
      _
    $region23: #{tpu_custom_call.1} parent=1 // pred_check_branch
      %57 = sbr.rel (0) target = $region25
    $region24: #{tpu_custom_call.1} parent=1 // pred_region
      %s59 = ssub.s32 1024, 1024
      %60 = vsyncadd [#allocation9], %s59
      %s61 = sshll.u32 [#allocation8], 4
      %s62 = int_to_ptr.vmem [resolvable:$true] %s61
      %67 = dma.hbm_to_vmem [thread:$0]  %s5, 1024, %s62, [#allocation9], 64, 64, 4
    $region25: #{tpu_custom_call.1} parent=1 // pred_fallthru
      _
    // Predicated region
    $region26: #{tpu_custom_call.1} parent=1 // pred_check
      _
    $region27: #{tpu_custom_call.1} parent=1 // pred_check_branch
      %69 = sbr.rel (0) target = $region29
    $region28: #{tpu_custom_call.1} parent=1 // pred_region
      _
    $region29: #{tpu_custom_call.1} parent=1 // pred_fallthru
      _
    // Predicated region
    $region30: #{tpu_custom_call.1} parent=1 // pred_check
      _
    $region31: #{tpu_custom_call.1} parent=1 // pred_check_branch
      %71 = sbr.rel (0) target = $region33
    $region32: #{tpu_custom_call.1} parent=1 // pred_region
      %72 = dma.done [#allocation3], 128
    $region33: #{tpu_custom_call.1} parent=1 // pred_fallthru
      _
    // Predicated region
    $region34: #{tpu_custom_call.1} parent=1 // pred_check
      _
    $region35: #{tpu_custom_call.1} parent=1 // pred_check_branch
      %74 = sbr.rel (0) target = $region37
    $region36: #{tpu_custom_call.1} parent=1 // pred_region
      %75 = dma.done [#allocation6], 1024
    $region37: #{tpu_custom_call.1} parent=1 // pred_fallthru
      _
    // Predicated region
    $region38: #{tpu_custom_call.1} parent=1 // pred_check
      _
    $region39: #{tpu_custom_call.1} parent=1 // pred_check_branch
      %77 = sbr.rel (0) target = $region41
    $region40: #{tpu_custom_call.1} parent=1 // pred_region
      %78 = dma.done [#allocation6], 1024
    $region41: #{tpu_custom_call.1} parent=1 // pred_fallthru
      _
    // Predicated region
    $region42: #{tpu_custom_call.1} parent=1 // pred_check
      _
    $region43: #{tpu_custom_call.1} parent=1 // pred_check_branch
      %80 = sbr.rel (0) target = $region45
    $region44: #{tpu_custom_call.1} parent=1 // pred_region
      %81 = dma.done [#allocation9], 1024
    $region45: #{tpu_custom_call.1} parent=1 // pred_fallthru
      _
    %v83 = vld [vmem:[#allocation2] sm:$0xf]
    %v84 = vld [vmem:[#allocation2 + $0x4] sm:$0xf]
    %v85 = vld [vmem:[#allocation5] sm:$0xf]
    %v86 = vld [vmem:[#allocation5 + $0x4] sm:$0xf]
    %v87 = vld [vmem:[#allocation5 + $0x8] sm:$0xf]
    %v88 = vld [vmem:[#allocation5 + $0xc] sm:$0xf]
    %v89 = vld [vmem:[#allocation5 + $0x10] sm:$0xf]
    %v90 = vld [vmem:[#allocation5 + $0x14] sm:$0xf]
    %v91 = vld [vmem:[#allocation5 + $0x18] sm:$0xf]
    %v92 = vld [vmem:[#allocation5 + $0x1c] sm:$0xf]
    %v93 = vld [vmem:[#allocation5 + $0x20] sm:$0xf]
    %v94 = vld [vmem:[#allocation5 + $0x24] sm:$0xf]
    %v95 = vld [vmem:[#allocation5 + $0x28] sm:$0xf]
    %v96 = vld [vmem:[#allocation5 + $0x2c] sm:$0xf]
    %v97 = vld [vmem:[#allocation5 + $0x30] sm:$0xf]
    %v98 = vld [vmem:[#allocation5 + $0x34] sm:$0xf]
    %v99 = vld [vmem:[#allocation5 + $0x38] sm:$0xf]
    %v100 = vld [vmem:[#allocation5 + $0x3c] sm:$0xf]
    %v101 = vld [vmem:[%s2] sm:$0x1]
    %v103 = vlaneseq
    %v104 = vshrl.u32 %v103, 7
    %v105 = vsub.s32 0, %v104
    %v106 = vrot.slane %v101, %v105
    %v110 = vunpack.c.l.b16 %v83
    %v111 = vunpack.c.l.b16 %v84
    %v112 = vpack.c.b16 %v111, %v110
    %v130 = vunpack.c.l.b16 %v85
    %v131 = vunpack.c.l.b16 %v86
    %v132 = vunpack.c.l.b16 %v87
    %v133 = vunpack.c.l.b16 %v88
    %v134 = vunpack.c.l.b16 %v89
    %v135 = vunpack.c.l.b16 %v90
    %v136 = vunpack.c.l.b16 %v91
    %v137 = vunpack.c.l.b16 %v92
    %v138 = vunpack.c.l.b16 %v93
    %v139 = vunpack.c.l.b16 %v94
    %v140 = vunpack.c.l.b16 %v95
    %v141 = vunpack.c.l.b16 %v96
    %v142 = vunpack.c.l.b16 %v97
    %v143 = vunpack.c.l.b16 %v98
    %v144 = vunpack.c.l.b16 %v99
    %v145 = vunpack.c.l.b16 %v100
    %v146 = vpack.c.b16 %v131, %v130
    %v147 = vpack.c.b16 %v133, %v132
    %v148 = vpack.c.b16 %v135, %v134
    %v149 = vpack.c.b16 %v137, %v136
    %v150 = vpack.c.b16 %v139, %v138
    %v151 = vpack.c.b16 %v141, %v140
    %v152 = vpack.c.b16 %v143, %v142
    %v153 = vpack.c.b16 %v145, %v144
    %162 = vmatprep.subr.bf16.mxu0 0
    %163 = vmatpush1.bf16.msra.mxu0 %v146
    %164 = vmatprep.subr.bf16.mxu0 0
    %165 = vmatpush1.bf16.msra.mxu0 %v147
    %166 = vmatprep.subr.bf16.mxu0 0
    %167 = vmatpush1.bf16.msra.mxu0 %v148
    %168 = vmatprep.subr.bf16.mxu0 0
    %169 = vmatpush1.bf16.msra.mxu0 %v149
    %170 = vmatprep.subr.bf16.mxu0 0
    %171 = vmatpush1.bf16.msra.mxu0 %v150
    %172 = vmatprep.subr.bf16.mxu0 0
    %173 = vmatpush1.bf16.msra.mxu0 %v151
    %174 = vmatprep.subr.bf16.mxu0 0
    %175 = vmatpush1.bf16.msra.mxu0 %v152
    %176 = vmatprep.subr.bf16.mxu0 0
    %177 = vmatpush1.bf16.msra.mxu0 %v153
    %178 = vmatprep.subr.bf16.mxu0 0
    %179 = vmatpush1.bf16.msra.mxu0 0
    %180 = vmatprep.subr.bf16.mxu0 0
    %181 = vmatpush1.bf16.msra.mxu0 0
    %182 = vmatprep.subr.bf16.mxu0 0
    %183 = vmatpush1.bf16.msra.mxu0 0
    %184 = vmatprep.subr.bf16.mxu0 0
    %185 = vmatpush1.bf16.msra.mxu0 0
    %186 = vmatprep.subr.bf16.mxu0 0
    %187 = vmatpush1.bf16.msra.mxu0 0
    %188 = vmatprep.subr.bf16.mxu0 0
    %189 = vmatpush1.bf16.msra.mxu0 0
    %190 = vmatprep.subr.bf16.mxu0 0
    %191 = vmatpush1.bf16.msra.mxu0 0
    %192 = vmatprep.subr.bf16.mxu0 0
    %193 = vmatpush1.bf16.msra.mxu0 0
    %194 = vmatprep.mubr.bf16.mxu0 0
    %195 = vmatmul.mubr.bf16.gmra.mrb[0].mxu0 %v112
    %v196 = vpop.f32.mrb[0].mxu0
    %v197 = vadd.f32 %v106, %v196
    %v198 = vpop.f32.mrb[0].mxu0
    %v199 = vpop.f32.mrb[0].mxu0
    %v200 = vadd.f32 %v106, %v199
    %v201 = vpop.f32.mrb[0].mxu0
    %202 = vdwg.mxu0
    %v203 = vmax.f32 %v197, 0.0
    %v204 = vmax.f32 %v200, 0.0
    %v205 = vpack.c.bf16 %v204, %v203
    %v206 = vld [vmem:[#allocation7] sm:$0xf]
    %v207 = vld [vmem:[#allocation7 + $0x4] sm:$0xf]
    %v208 = vld [vmem:[#allocation7 + $0x8] sm:$0xf]
    %v209 = vld [vmem:[#allocation7 + $0xc] sm:$0xf]
    %v210 = vld [vmem:[#allocation7 + $0x10] sm:$0xf]
    %v211 = vld [vmem:[#allocation7 + $0x14] sm:$0xf]
    %v212 = vld [vmem:[#allocation7 + $0x18] sm:$0xf]
    %v213 = vld [vmem:[#allocation7 + $0x1c] sm:$0xf]
    %v214 = vld [vmem:[#allocation7 + $0x20] sm:$0xf]
    %v215 = vld [vmem:[#allocation7 + $0x24] sm:$0xf]
    %v216 = vld [vmem:[#allocation7 + $0x28] sm:$0xf]
    %v217 = vld [vmem:[#allocation7 + $0x2c] sm:$0xf]
    %v218 = vld [vmem:[#allocation7 + $0x30] sm:$0xf]
    %v219 = vld [vmem:[#allocation7 + $0x34] sm:$0xf]
    %v220 = vld [vmem:[#allocation7 + $0x38] sm:$0xf]
    %v221 = vld [vmem:[#allocation7 + $0x3c] sm:$0xf]
    %v222 = vld [vmem:[%s4] sm:$0x1]
    %v224 = vlaneseq
    %v225 = vshrl.u32 %v224, 7
    %v226 = vsub.s32 0, %v225
    %v227 = vrot.slane %v222, %v226
    %v245 = vunpack.c.l.b16 %v206
    %v246 = vunpack.c.l.b16 %v207
    %v247 = vunpack.c.l.b16 %v208
    %v248 = vunpack.c.l.b16 %v209
    %v249 = vunpack.c.l.b16 %v210
    %v250 = vunpack.c.l.b16 %v211
    %v251 = vunpack.c.l.b16 %v212
    %v252 = vunpack.c.l.b16 %v213
    %v253 = vunpack.c.l.b16 %v214
    %v254 = vunpack.c.l.b16 %v215
    %v255 = vunpack.c.l.b16 %v216
    %v256 = vunpack.c.l.b16 %v217
    %v257 = vunpack.c.l.b16 %v218
    %v258 = vunpack.c.l.b16 %v219
    %v259 = vunpack.c.l.b16 %v220
    %v260 = vunpack.c.l.b16 %v221
    %v261 = vpack.c.b16 %v246, %v245
    %v262 = vpack.c.b16 %v248, %v247
    %v263 = vpack.c.b16 %v250, %v249
    %v264 = vpack.c.b16 %v252, %v251
    %v265 = vpack.c.b16 %v254, %v253
    %v266 = vpack.c.b16 %v256, %v255
    %v267 = vpack.c.b16 %v258, %v257
    %v268 = vpack.c.b16 %v260, %v259
    %277 = vmatprep.subr.bf16.mxu0 0
    %278 = vmatpush1.bf16.msra.mxu0 %v261
    %279 = vmatprep.subr.bf16.mxu0 0
    %280 = vmatpush1.bf16.msra.mxu0 %v262
    %281 = vmatprep.subr.bf16.mxu0 0
    %282 = vmatpush1.bf16.msra.mxu0 %v263
    %283 = vmatprep.subr.bf16.mxu0 0
    %284 = vmatpush1.bf16.msra.mxu0 %v264
    %285 = vmatprep.subr.bf16.mxu0 0
    %286 = vmatpush1.bf16.msra.mxu0 %v265
    %287 = vmatprep.subr.bf16.mxu0 0
    %288 = vmatpush1.bf16.msra.mxu0 %v266
    %289 = vmatprep.subr.bf16.mxu0 0
    %290 = vmatpush1.bf16.msra.mxu0 %v267
    %291 = vmatprep.subr.bf16.mxu0 0
    %292 = vmatpush1.bf16.msra.mxu0 %v268
    %293 = vmatprep.subr.bf16.mxu0 0
    %294 = vmatpush1.bf16.msra.mxu0 0
    %295 = vmatprep.subr.bf16.mxu0 0
    %296 = vmatpush1.bf16.msra.mxu0 0
    %297 = vmatprep.subr.bf16.mxu0 0
    %298 = vmatpush1.bf16.msra.mxu0 0
    %299 = vmatprep.subr.bf16.mxu0 0
    %300 = vmatpush1.bf16.msra.mxu0 0
    %301 = vmatprep.subr.bf16.mxu0 0
    %302 = vmatpush1.bf16.msra.mxu0 0
    %303 = vmatprep.subr.bf16.mxu0 0
    %304 = vmatpush1.bf16.msra.mxu0 0
    %305 = vmatprep.subr.bf16.mxu0 0
    %306 = vmatpush1.bf16.msra.mxu0 0
    %307 = vmatprep.subr.bf16.mxu0 0
    %308 = vmatpush1.bf16.msra.mxu0 0
    %309 = vmatprep.mubr.bf16.mxu0 0
    %310 = vmatmul.mubr.bf16.gmra.mrb[0].mxu0 %v205
    %v311 = vpop.f32.mrb[0].mxu0
    %v312 = vadd.f32 %v227, %v311
    %v313 = vpop.f32.mrb[0].mxu0
    %v314 = vpop.f32.mrb[0].mxu0
    %v315 = vadd.f32 %v227, %v314
    %v316 = vpop.f32.mrb[0].mxu0
    %317 = vdwg.mxu0
    %v318 = vmax.f32 %v312, 0.0
    %v319 = vmax.f32 %v315, 0.0
    %v320 = vpack.c.bf16 %v319, %v318
    %v321 = vld [vmem:[#allocation8] sm:$0xf]
    %v322 = vld [vmem:[#allocation8 + $0x4] sm:$0xf]
    %v323 = vld [vmem:[#allocation8 + $0x8] sm:$0xf]
    %v324 = vld [vmem:[#allocation8 + $0xc] sm:$0xf]
    %v325 = vld [vmem:[#allocation8 + $0x10] sm:$0xf]
    %v326 = vld [vmem:[#allocation8 + $0x14] sm:$0xf]
    %v327 = vld [vmem:[#allocation8 + $0x18] sm:$0xf]
    %v328 = vld [vmem:[#allocation8 + $0x1c] sm:$0xf]
    %v329 = vld [vmem:[#allocation8 + $0x20] sm:$0xf]
    %v330 = vld [vmem:[#allocation8 + $0x24] sm:$0xf]
    %v331 = vld [vmem:[#allocation8 + $0x28] sm:$0xf]
    %v332 = vld [vmem:[#allocation8 + $0x2c] sm:$0xf]
    %v333 = vld [vmem:[#allocation8 + $0x30] sm:$0xf]
    %v334 = vld [vmem:[#allocation8 + $0x34] sm:$0xf]
    %v335 = vld [vmem:[#allocation8 + $0x38] sm:$0xf]
    %v336 = vld [vmem:[#allocation8 + $0x3c] sm:$0xf]
    %v337 = vld [vmem:[%s6] sm:$0x1]
    %v339 = vlaneseq
    %v340 = vshrl.u32 %v339, 7
    %v341 = vsub.s32 0, %v340
    %v342 = vrot.slane %v337, %v341
    %v360 = vunpack.c.l.b16 %v321
    %v361 = vunpack.c.l.b16 %v322
    %v362 = vunpack.c.l.b16 %v323
    %v363 = vunpack.c.l.b16 %v324
    %v364 = vunpack.c.l.b16 %v325
    %v365 = vunpack.c.l.b16 %v326
    %v366 = vunpack.c.l.b16 %v327
    %v367 = vunpack.c.l.b16 %v328
    %v368 = vunpack.c.l.b16 %v329
    %v369 = vunpack.c.l.b16 %v330
    %v370 = vunpack.c.l.b16 %v331
    %v371 = vunpack.c.l.b16 %v332
    %v372 = vunpack.c.l.b16 %v333
    %v373 = vunpack.c.l.b16 %v334
    %v374 = vunpack.c.l.b16 %v335
    %v375 = vunpack.c.l.b16 %v336
    %v376 = vpack.c.b16 %v361, %v360
    %v377 = vpack.c.b16 %v363, %v362
    %v378 = vpack.c.b16 %v365, %v364
    %v379 = vpack.c.b16 %v367, %v366
    %v380 = vpack.c.b16 %v369, %v368
    %v381 = vpack.c.b16 %v371, %v370
    %v382 = vpack.c.b16 %v373, %v372
    %v383 = vpack.c.b16 %v375, %v374
    %392 = vmatprep.subr.bf16.mxu0 0
    %393 = vmatpush1.bf16.msra.mxu0 %v376
    %394 = vmatprep.subr.bf16.mxu0 0
    %395 = vmatpush1.bf16.msra.mxu0 %v377
    %396 = vmatprep.subr.bf16.mxu0 0
    %397 = vmatpush1.bf16.msra.mxu0 %v378
    %398 = vmatprep.subr.bf16.mxu0 0
    %399 = vmatpush1.bf16.msra.mxu0 %v379
    %400 = vmatprep.subr.bf16.mxu0 0
    %401 = vmatpush1.bf16.msra.mxu0 %v380
    %402 = vmatprep.subr.bf16.mxu0 0
    %403 = vmatpush1.bf16.msra.mxu0 %v381
    %404 = vmatprep.subr.bf16.mxu0 0
    %405 = vmatpush1.bf16.msra.mxu0 %v382
    %406 = vmatprep.subr.bf16.mxu0 0
    %407 = vmatpush1.bf16.msra.mxu0 %v383
    %408 = vmatprep.subr.bf16.mxu0 0
    %409 = vmatpush1.bf16.msra.mxu0 0
    %410 = vmatprep.subr.bf16.mxu0 0
    %411 = vmatpush1.bf16.msra.mxu0 0
    %412 = vmatprep.subr.bf16.mxu0 0
    %413 = vmatpush1.bf16.msra.mxu0 0
    %414 = vmatprep.subr.bf16.mxu0 0
    %415 = vmatpush1.bf16.msra.mxu0 0
    %416 = vmatprep.subr.bf16.mxu0 0
    %417 = vmatpush1.bf16.msra.mxu0 0
    %418 = vmatprep.subr.bf16.mxu0 0
    %419 = vmatpush1.bf16.msra.mxu0 0
    %420 = vmatprep.subr.bf16.mxu0 0
    %421 = vmatpush1.bf16.msra.mxu0 0
    %422 = vmatprep.subr.bf16.mxu0 0
    %423 = vmatpush1.bf16.msra.mxu0 0
    %424 = vmatprep.mubr.bf16.mxu0 0
    %425 = vmatmul.mubr.bf16.gmra.mrb[0].mxu0 %v320
    %v426 = vpop.f32.mrb[0].mxu0
    %v427 = vadd.f32 %v342, %v426
    %v428 = vpop.f32.mrb[0].mxu0
    %v429 = vpop.f32.mrb[0].mxu0
    %v430 = vadd.f32 %v342, %v429
    %v431 = vpop.f32.mrb[0].mxu0
    %432 = vdwg.mxu0
    %v433 = vlaneseq
    %v434 = vand.u32 %v433, 127
    %v435 = vtanh.pop %v427
    %v436 = vtanh.pop %v430
    %vm437 = vcmp.gt.f32.partialorder %v427, 20.0
    %vm438 = vcmp.gt.f32.partialorder %v430, 20.0
    %v439 = vmin.f32 %v427, 20.0
    %v440 = vmin.f32 %v430, 20.0
    %v441 = vmul.f32 %v439, 1.442695
    %v442 = vpow.pop %v441
    %v443 = vmul.f32 %v440, 1.442695
    %v444 = vpow.pop %v443
    %v445 = vadd.f32 %v442, 1.0
    %v446 = vlog2.pop %v445
    %v447 = vmul.f32 %v446, 0.6931472
    %v448 = vmul.f32 -0.5, %v442
    %v449 = vadd.f32 %v448, 1.0
    %v450 = vmul.f32 %v449, %v442
    %v451 = vand.u32 2147483647, %v442
    %vm452 = vcmp.lt.f32.partialorder %v451, 0.0004427343
    %v453 = vsel %vm452, %v450, %v447
    %v454 = vadd.f32 %v444, 1.0
    %v455 = vlog2.pop %v454
    %v456 = vmul.f32 %v455, 0.6931472
    %v457 = vmul.f32 -0.5, %v444
    %v458 = vadd.f32 %v457, 1.0
    %v459 = vmul.f32 %v458, %v444
    %v460 = vand.u32 2147483647, %v444
    %vm461 = vcmp.lt.f32.partialorder %v460, 0.0004427343
    %v462 = vsel %vm461, %v459, %v456
    %v463 = vsel %vm437, %v427, %v453
    %v464 = vsel %vm438, %v430, %v462
    %v465 = vadd.f32 %v463, 1e-05
    %v466 = vadd.f32 %v464, 1e-05
    %vm467 = vcmp.lt.s32.totalorder %v434, 64
    %v468 = vsel %vm467, %v435, %v465
    %v469 = vsel %vm467, %v436, %v466
    %470 = vst [vmem:[#allocation10] sm:$0xff] %v468
    %471 = vst [vmem:[#allocation10 + $0x8] sm:$0xff] %v469
    // Predicated region
    $region46: #{tpu_custom_call.1} parent=1 // pred_check
      _
    $region47: #{tpu_custom_call.1} parent=1 // pred_check_branch
      %473 = sbr.rel (0) target = $region49
    $region48: #{tpu_custom_call.1} parent=1 // pred_region
      %s475 = ssub.s32 256, 256
      %476 = vsyncadd [#allocation4], %s475
      %s477 = sshll.u32 [#allocation10], 4
      %s478 = int_to_ptr.vmem [resolvable:$true] %s477
      %483 = dma.vmem_to_hbm [thread:$0]  %s478, 256, %s7, [#allocation4], 128, 128, 8
    $region49: #{tpu_custom_call.1} parent=1 // pred_fallthru
      _
    // Predicated region
    $region50: #{tpu_custom_call.1} parent=1 // pred_check
      _
    $region51: #{tpu_custom_call.1} parent=1 // pred_check_branch
      %485 = sbr.rel (0) target = $region53
    $region52: #{tpu_custom_call.1} parent=1 // pred_region
      %486 = dma.done [#allocation4], 256
    $region53: #{tpu_custom_call.1} parent=1 // pred_fallthru
      _
    %487 = vsyncpa [#allocation3], 1
    %488 = vsyncpa [#allocation6], 1
    %489 = vsyncpa [#allocation9], 1
    %490 = vsyncpa [#allocation4], 1

</llo_original>
